<compile_context>
chip_gen: v7x
topology: tpu7x:2x2x1
jax: 0.10.0
libtpu: 0.0.40
codegen_flags: <defaults>
</compile_context>

<pallas_src>
import jax
import jax.numpy as jnp
from jax.experimental import pallas as pl
from jax.experimental.pallas import tpu as pltpu


def _var_kernel(x_ref, o_ref):
    # x_ref: (TILE_R, T) tile in VMEM; reduce over the last (lane) axis.
    x = x_ref[...].astype(jnp.float32)
    n = x.shape[-1]

    # One-pass shifted sum / sum-of-squares. Subtracting a per-row pivot
    # (the first column) avoids catastrophic cancellation when |mean| >> std
    # while keeping only a single full-tile temporary live in vregs/VMEM.
    d = x - x[:, 0:1]
    s = jnp.sum(d, axis=-1, keepdims=True)
    ss = jnp.sum(d * d, axis=-1, keepdims=True)

    if n > 1:
        inv_denom = 1.0 / (n - 1)          # unbiased (torch.var default)
    else:
        inv_denom = float("nan")           # torch.var(unbiased=True) on 1 elem -> NaN
    var = (ss - s * s * (1.0 / n)) * inv_denom
    o_ref[...] = var.astype(o_ref.dtype)


def _pick_tile_r(R: int, T: int, itemsize: int) -> int:
    """Pick a row-tile size from a per-generation-safe VMEM budget.

    Keeps 2 (double-buffer) x TILE_R x T x itemsize ~<= 12 MiB, under the
    default scoped VMEM limit on every generation (16 MiB v5e, 32 MiB
    v6e/v7x; v7x also only has 64 MiB physical per TensorCore).
    """
    budget_bytes = 6 * 1024 * 1024                      # per input buffer
    align = 8 if itemsize >= 4 else (32 // itemsize)    # sublane packing (bf16 -> 16)
    tile = budget_bytes // max(T * itemsize, 1)
    tile = max(align, min(tile, 1024))
    tile = (tile // align) * align
    if tile >= R:
        return R                                        # single full block (legal)
    return tile


def _var_rows(x2d: jax.Array) -> jax.Array:
    """Unbiased variance along last axis of a 2D array, keepdim: (R, T) -> (R, 1)."""
    R, T = x2d.shape
    itemsize = jnp.dtype(x2d.dtype).itemsize
    tile_r = _pick_tile_r(R, T, itemsize)
    num_tiles = pl.cdiv(R, tile_r)

    return pl.pallas_call(
        _var_kernel,
        out_shape=jax.ShapeDtypeStruct((R, 1), x2d.dtype),
        grid=(num_tiles,),
        in_specs=[pl.BlockSpec((tile_r, T), lambda i: (i, 0))],
        out_specs=pl.BlockSpec((tile_r, 1), lambda i: (i, 0)),
        compiler_params=pltpu.CompilerParams(
            dimension_semantics=("parallel",),
        ),
    )(x2d)


def var_layer(x: jax.Array, dim: int = 3) -> jax.Array:
    """Pallas equivalent of VarLayer(dim).forward(x)."""
    ndim = x.ndim
    dim = dim % ndim

    if dim != ndim - 1:
        # Non-last reduction dims move the axis onto lanes; XLA materializes
        # this transpose (one extra HBM round trip). The FBCNet default
        # (dim=3, the time axis = last axis) takes the transpose-free path.
        # TODO(synk): fold non-last dims into an in-kernel sublane reduction
        # to avoid the wrapper transpose entirely.
        perm = [d for d in range(ndim) if d != dim] + [dim]
        xt = jnp.transpose(x, perm)
    else:
        perm = list(range(ndim))
        xt = x

    lead_shape = xt.shape[:-1]
    T = xt.shape[-1]
    R = 1
    for s in lead_shape:
        R *= s
    x2d = xt.reshape(R, T)

    v = _var_rows(x2d)                 # (R, 1)
    v = v.reshape(*lead_shape, 1)      # keepdim=True on the reduced axis

    if dim != ndim - 1:
        inv_perm = [0] * ndim
        for i, p in enumerate(perm):
            inv_perm[p] = i
        v = jnp.transpose(v, inv_perm)
    return v


if __name__ == "__main__":
    key = jax.random.PRNGKey(0)
    # Small NCHW-style input: (batch=2, bands=4, channels=16, time=16)
    x = jax.random.normal(key, (2, 4, 16, 16), dtype=jnp.float32)

    dim = 3  # FBCNet uses the time axis
    y = var_layer(x, dim=dim)
    y = jax.block_until_ready(y)

    # Reference check against jnp unbiased variance (matches torch.var default).
    y_ref = jnp.var(x, axis=dim, keepdims=True, ddof=1)
    assert y.shape == (2, 4, 16, 1), y.shape
    assert jnp.allclose(y, y_ref, atol=1e-5, rtol=1e-5)

    # Also exercise the non-last-dim path (dim=2, channel axis).
    y2 = jax.block_until_ready(var_layer(x, dim=2))
    y2_ref = jnp.var(x, axis=2, keepdims=True, ddof=1)
    assert y2.shape == (2, 4, 1, 16), y2.shape
    assert jnp.allclose(y2, y2_ref, atol=1e-5, rtol=1e-5)

    print("KERNEL_OK")
</pallas_src>

<mosaic_0001>
module attributes {stable_mosaic.version = 11 : i64} {
  func.func @_var_kernel(%arg0: i32, %arg1: memref<128x16xf32, #tpu.memory_space<vmem>>, %arg2: memref<128x1xf32, #tpu.memory_space<vmem>>) attributes {dimension_semantics = [#tpu.dimension_semantics<parallel>], iteration_bounds = array<i64: 1>, scalar_prefetch = 0 : i64, scratch_operands = 0 : i64, tpu.core_type = #tpu.core_type<tc>, window_params = [{transform_indices = @transform_0, window_bounds = array<i64: 128, 16>}, {transform_indices = @transform_1, window_bounds = array<i64: 128, 1>}]} {
    %c0 = arith.constant 0 : index
    %c0_0 = arith.constant 0 : index
    %0 = vector.load %arg1[%c0, %c0_0] : memref<128x16xf32, #tpu.memory_space<vmem>>, vector<128x16xf32>
    %1 = vector.extract_strided_slice %0 {offsets = [0, 0], sizes = [128, 1], strides = [1, 1]} : vector<128x16xf32> to vector<128x1xf32>
    %2 = vector.broadcast %1 : vector<128x1xf32> to vector<128x16xf32>
    %3 = arith.subf %0, %2 : vector<128x16xf32>
    %cst = arith.constant dense<0.000000e+00> : vector<128xf32>
    %4 = vector.multi_reduction <add>, %3, %cst [1] : vector<128x16xf32> to vector<128xf32>
    %5 = vector.shape_cast %4 : vector<128xf32> to vector<128x1xf32>
    %6 = arith.mulf %3, %3 : vector<128x16xf32>
    %cst_1 = arith.constant dense<0.000000e+00> : vector<128xf32>
    %7 = vector.multi_reduction <add>, %6, %cst_1 [1] : vector<128x16xf32> to vector<128xf32>
    %8 = vector.shape_cast %7 : vector<128xf32> to vector<128x1xf32>
    %9 = arith.mulf %5, %5 : vector<128x1xf32>
    %cst_2 = arith.constant 6.250000e-02 : f32
    %10 = vector.broadcast %cst_2 : f32 to vector<128x1xf32>
    %11 = arith.mulf %9, %10 : vector<128x1xf32>
    %12 = arith.subf %8, %11 : vector<128x1xf32>
    %cst_3 = arith.constant 0.0666666701 : f32
    %13 = vector.broadcast %cst_3 : f32 to vector<128x1xf32>
    %14 = arith.mulf %12, %13 : vector<128x1xf32>
    %c0_4 = arith.constant 0 : index
    %c0_5 = arith.constant 0 : index
    %15 = vector.load %arg2[%c0_4, %c0_5] : memref<128x1xf32, #tpu.memory_space<vmem>>, vector<128x1xf32>
    tpu.vector_store %arg2[%c0_4, %c0_5], %14 {strides = array<i32>} : memref<128x1xf32, #tpu.memory_space<vmem>>, vector<128x1xf32>,
    return
  }
  func.func @transform_0(%arg0: i32) -> (i32, i32) {
    %c0_i32 = arith.constant 0 : i32
    %c0_i32_0 = arith.constant 0 : i32
    return %arg0, %c0_i32 : i32, i32
  }
  func.func @transform_1(%arg0: i32) -> (i32, i32) {
    %c0_i32 = arith.constant 0 : i32
    %c0_i32_0 = arith.constant 0 : i32
    return %arg0, %c0_i32 : i32, i32
  }
}

</mosaic_0001>

<llo_original>
// kernel: tpu_custom_call.1
$region0: #{tpu_custom_call.1}
  #allocation0 [shape = 'u32[]', space=smem, size = 0x4, offset = 0x4, fixed_abs, tag = 'smem constant byte address 0x4 - core index']
  #allocation1 [shape = 'u32[144,128]{1,0:T(1,128)}', space=vmem, size = 0x12000, scoped, tag = 'internal scratch']
  %s0 = inlined_call_operand.vmem [shape: f32[128,16], index: 0, kind: input, shape index: {}]
  %s1 = inlined_call_operand.vmem [shape: f32[128,1], index: 1, kind: output, shape index: {}]
  %s2 = sld [smem:[#allocation0]]
  $region14: #{tpu_custom_call.1} parent=0
    _
  %s4 = ssub.s32 1, %s2
  %s5 = scalar_select 0, %s4, %s2
  // Predicated region
  $region2: #{tpu_custom_call.1} parent=0 // pred_check
    _
  $region3: #{tpu_custom_call.1} parent=0 // pred_check_branch
    %7 = sbr.rel (0) target = $region5
  $region4: #{tpu_custom_call.1} parent=0 // pred_region
    _
  $region5: #{tpu_custom_call.1} parent=0 // pred_fallthru
    _
  %v8 = vld [vmem:[%s0] sm:$0xff]
  %v9 = vld [vmem:[%s0 + $0x8] sm:$0xff]
  %v10 = vld [vmem:[%s0 + $0x10] sm:$0xff]
  %v11 = vld [vmem:[%s0 + $0x18] sm:$0xff]
  %v12 = vld [vmem:[%s0 + $0x20] sm:$0xff]
  %v13 = vld [vmem:[%s0 + $0x28] sm:$0xff]
  %v14 = vld [vmem:[%s0 + $0x30] sm:$0xff]
  %v15 = vld [vmem:[%s0 + $0x38] sm:$0xff]
  %v16 = vld [vmem:[%s0 + $0x40] sm:$0xff]
  %v17 = vld [vmem:[%s0 + $0x48] sm:$0xff]
  %v18 = vld [vmem:[%s0 + $0x50] sm:$0xff]
  %v19 = vld [vmem:[%s0 + $0x58] sm:$0xff]
  %v20 = vld [vmem:[%s0 + $0x60] sm:$0xff]
  %v21 = vld [vmem:[%s0 + $0x68] sm:$0xff]
  %v22 = vld [vmem:[%s0 + $0x70] sm:$0xff]
  %v23 = vld [vmem:[%s0 + $0x78] sm:$0xff]
  %25 = vset.pattern.permute.xlu0 0
  %26 = vperm.xlu0 %25, %v8
  %v27 = vpop.permute.xlu0 %26
  %30 = vset.pattern.permute.xlu0 0
  %31 = vperm.xlu0 %30, %v9
  %v32 = vpop.permute.xlu0 %31
  %35 = vset.pattern.permute.xlu0 0
  %36 = vperm.xlu0 %35, %v10
  %v37 = vpop.permute.xlu0 %36
  %40 = vset.pattern.permute.xlu0 0
  %41 = vperm.xlu0 %40, %v11
  %v42 = vpop.permute.xlu0 %41
  %45 = vset.pattern.permute.xlu0 0
  %46 = vperm.xlu0 %45, %v12
  %v47 = vpop.permute.xlu0 %46
  %50 = vset.pattern.permute.xlu0 0
  %51 = vperm.xlu0 %50, %v13
  %v52 = vpop.permute.xlu0 %51
  %55 = vset.pattern.permute.xlu0 0
  %56 = vperm.xlu0 %55, %v14
  %v57 = vpop.permute.xlu0 %56
  %60 = vset.pattern.permute.xlu0 0
  %61 = vperm.xlu0 %60, %v15
  %v62 = vpop.permute.xlu0 %61
  %65 = vset.pattern.permute.xlu0 0
  %66 = vperm.xlu0 %65, %v16
  %v67 = vpop.permute.xlu0 %66
  %70 = vset.pattern.permute.xlu0 0
  %71 = vperm.xlu0 %70, %v17
  %v72 = vpop.permute.xlu0 %71
  %75 = vset.pattern.permute.xlu0 0
  %76 = vperm.xlu0 %75, %v18
  %v77 = vpop.permute.xlu0 %76
  %80 = vset.pattern.permute.xlu0 0
  %81 = vperm.xlu0 %80, %v19
  %v82 = vpop.permute.xlu0 %81
  %85 = vset.pattern.permute.xlu0 0
  %86 = vperm.xlu0 %85, %v20
  %v87 = vpop.permute.xlu0 %86
  %90 = vset.pattern.permute.xlu0 0
  %91 = vperm.xlu0 %90, %v21
  %v92 = vpop.permute.xlu0 %91
  %95 = vset.pattern.permute.xlu0 0
  %96 = vperm.xlu0 %95, %v22
  %v97 = vpop.permute.xlu0 %96
  %100 = vset.pattern.permute.xlu0 0
  %101 = vperm.xlu0 %100, %v23
  %v102 = vpop.permute.xlu0 %101
  %v104 = vsub.f32 %v8, %v27
  %v105 = vsub.f32 %v9, %v32
  %v106 = vsub.f32 %v10, %v37
  %v107 = vsub.f32 %v11, %v42
  %v108 = vsub.f32 %v12, %v47
  %v109 = vsub.f32 %v13, %v52
  %v110 = vsub.f32 %v14, %v57
  %v111 = vsub.f32 %v15, %v62
  %v112 = vsub.f32 %v16, %v67
  %v113 = vsub.f32 %v17, %v72
  %v114 = vsub.f32 %v18, %v77
  %v115 = vsub.f32 %v19, %v82
  %v116 = vsub.f32 %v20, %v87
  %v117 = vsub.f32 %v21, %v92
  %v118 = vsub.f32 %v22, %v97
  %v119 = vsub.f32 %v23, %v102
  %vm120 = vcmask 130048
  %v121 = vsel %vm120, %v104, 0.0
  %122 = vadd.xlane.f32.xlu0 %v121
  %v123 = vpop.xlane.xlu0 %122
  %v124 = vsel %vm120, %v105, 0.0
  %125 = vadd.xlane.f32.xlu0 %v124
  %v126 = vpop.xlane.xlu0 %125
  %v127 = vsel %vm120, %v106, 0.0
  %128 = vadd.xlane.f32.xlu0 %v127
  %v129 = vpop.xlane.xlu0 %128
  %v130 = vsel %vm120, %v107, 0.0
  %131 = vadd.xlane.f32.xlu0 %v130
  %v132 = vpop.xlane.xlu0 %131
  %v133 = vsel %vm120, %v108, 0.0
  %134 = vadd.xlane.f32.xlu0 %v133
  %v135 = vpop.xlane.xlu0 %134
  %v136 = vsel %vm120, %v109, 0.0
  %137 = vadd.xlane.f32.xlu0 %v136
  %v138 = vpop.xlane.xlu0 %137
  %v139 = vsel %vm120, %v110, 0.0
  %140 = vadd.xlane.f32.xlu0 %v139
  %v141 = vpop.xlane.xlu0 %140
  %v142 = vsel %vm120, %v111, 0.0
  %143 = vadd.xlane.f32.xlu0 %v142
  %v144 = vpop.xlane.xlu0 %143
  %v145 = vsel %vm120, %v112, 0.0
  %146 = vadd.xlane.f32.xlu0 %v145
  %v147 = vpop.xlane.xlu0 %146
  %v148 = vsel %vm120, %v113, 0.0
  %149 = vadd.xlane.f32.xlu0 %v148
  %v150 = vpop.xlane.xlu0 %149
  %v151 = vsel %vm120, %v114, 0.0
  %152 = vadd.xlane.f32.xlu0 %v151
  %v153 = vpop.xlane.xlu0 %152
  %v154 = vsel %vm120, %v115, 0.0
  %155 = vadd.xlane.f32.xlu0 %v154
  %v156 = vpop.xlane.xlu0 %155
  %v157 = vsel %vm120, %v116, 0.0
  %158 = vadd.xlane.f32.xlu0 %v157
  %v159 = vpop.xlane.xlu0 %158
  %v160 = vsel %vm120, %v117, 0.0
  %161 = vadd.xlane.f32.xlu0 %v160
  %v162 = vpop.xlane.xlu0 %161
  %v163 = vsel %vm120, %v118, 0.0
  %164 = vadd.xlane.f32.xlu0 %v163
  %v165 = vpop.xlane.xlu0 %164
  %v166 = vsel %vm120, %v119, 0.0
  %167 = vadd.xlane.f32.xlu0 %v166
  %v168 = vpop.xlane.xlu0 %167
  %v169 = vmul.f32 %v104, %v104
  %v170 = vmul.f32 %v105, %v105
  %v171 = vmul.f32 %v106, %v106
  %v172 = vmul.f32 %v107, %v107
  %v173 = vmul.f32 %v108, %v108
  %v174 = vmul.f32 %v109, %v109
  %v175 = vmul.f32 %v110, %v110
  %v176 = vmul.f32 %v111, %v111
  %v177 = vmul.f32 %v112, %v112
  %v178 = vmul.f32 %v113, %v113
  %v179 = vmul.f32 %v114, %v114
  %v180 = vmul.f32 %v115, %v115
  %v181 = vmul.f32 %v116, %v116
  %v182 = vmul.f32 %v117, %v117
  %v183 = vmul.f32 %v118, %v118
  %v184 = vmul.f32 %v119, %v119
  %v185 = vsel %vm120, %v169, 0.0
  %186 = vadd.xlane.f32.xlu0 %v185
  %v187 = vpop.xlane.xlu0 %186
  %v188 = vsel %vm120, %v170, 0.0
  %189 = vadd.xlane.f32.xlu0 %v188
  %v190 = vpop.xlane.xlu0 %189
  %v191 = vsel %vm120, %v171, 0.0
  %192 = vadd.xlane.f32.xlu0 %v191
  %v193 = vpop.xlane.xlu0 %192
  %v194 = vsel %vm120, %v172, 0.0
  %195 = vadd.xlane.f32.xlu0 %v194
  %v196 = vpop.xlane.xlu0 %195
  %v197 = vsel %vm120, %v173, 0.0
  %198 = vadd.xlane.f32.xlu0 %v197
  %v199 = vpop.xlane.xlu0 %198
  %v200 = vsel %vm120, %v174, 0.0
  %201 = vadd.xlane.f32.xlu0 %v200
  %v202 = vpop.xlane.xlu0 %201
  %v203 = vsel %vm120, %v175, 0.0
  %204 = vadd.xlane.f32.xlu0 %v203
  %v205 = vpop.xlane.xlu0 %204
  %v206 = vsel %vm120, %v176, 0.0
  %207 = vadd.xlane.f32.xlu0 %v206
  %v208 = vpop.xlane.xlu0 %207
  %v209 = vsel %vm120, %v177, 0.0
  %210 = vadd.xlane.f32.xlu0 %v209
  %v211 = vpop.xlane.xlu0 %210
  %v212 = vsel %vm120, %v178, 0.0
  %213 = vadd.xlane.f32.xlu0 %v212
  %v214 = vpop.xlane.xlu0 %213
  %v215 = vsel %vm120, %v179, 0.0
  %216 = vadd.xlane.f32.xlu0 %v215
  %v217 = vpop.xlane.xlu0 %216
  %v218 = vsel %vm120, %v180, 0.0
  %219 = vadd.xlane.f32.xlu0 %v218
  %v220 = vpop.xlane.xlu0 %219
  %v221 = vsel %vm120, %v181, 0.0
  %222 = vadd.xlane.f32.xlu0 %v221
  %v223 = vpop.xlane.xlu0 %222
  %v224 = vsel %vm120, %v182, 0.0
  %225 = vadd.xlane.f32.xlu0 %v224
  %v226 = vpop.xlane.xlu0 %225
  %v227 = vsel %vm120, %v183, 0.0
  %228 = vadd.xlane.f32.xlu0 %v227
  %v229 = vpop.xlane.xlu0 %228
  %v230 = vsel %vm120, %v184, 0.0
  %231 = vadd.xlane.f32.xlu0 %v230
  %v232 = vpop.xlane.xlu0 %231
  %v233 = vmul.f32 %v123, %v123
  %v234 = vmul.f32 %v126, %v126
  %v235 = vmul.f32 %v129, %v129
  %v236 = vmul.f32 %v132, %v132
  %v237 = vmul.f32 %v135, %v135
  %v238 = vmul.f32 %v138, %v138
  %v239 = vmul.f32 %v141, %v141
  %v240 = vmul.f32 %v144, %v144
  %v241 = vmul.f32 %v147, %v147
  %v242 = vmul.f32 %v150, %v150
  %v243 = vmul.f32 %v153, %v153
  %v244 = vmul.f32 %v156, %v156
  %v245 = vmul.f32 %v159, %v159
  %v246 = vmul.f32 %v162, %v162
  %v247 = vmul.f32 %v165, %v165
  %v248 = vmul.f32 %v168, %v168
  %v249 = vmul.f32 %v233, 0.0625
  %v250 = vmul.f32 %v234, 0.0625
  %v251 = vmul.f32 %v235, 0.0625
  %v252 = vmul.f32 %v236, 0.0625
  %v253 = vmul.f32 %v237, 0.0625
  %v254 = vmul.f32 %v238, 0.0625
  %v255 = vmul.f32 %v239, 0.0625
  %v256 = vmul.f32 %v240, 0.0625
  %v257 = vmul.f32 %v241, 0.0625
  %v258 = vmul.f32 %v242, 0.0625
  %v259 = vmul.f32 %v243, 0.0625
  %v260 = vmul.f32 %v244, 0.0625
  %v261 = vmul.f32 %v245, 0.0625
  %v262 = vmul.f32 %v246, 0.0625
  %v263 = vmul.f32 %v247, 0.0625
  %v264 = vmul.f32 %v248, 0.0625
  %v265 = vsub.f32 %v187, %v249
  %v266 = vsub.f32 %v190, %v250
  %v267 = vsub.f32 %v193, %v251
  %v268 = vsub.f32 %v196, %v252
  %v269 = vsub.f32 %v199, %v253
  %v270 = vsub.f32 %v202, %v254
  %v271 = vsub.f32 %v205, %v255
  %v272 = vsub.f32 %v208, %v256
  %v273 = vsub.f32 %v211, %v257
  %v274 = vsub.f32 %v214, %v258
  %v275 = vsub.f32 %v217, %v259
  %v276 = vsub.f32 %v220, %v260
  %v277 = vsub.f32 %v223, %v261
  %v278 = vsub.f32 %v226, %v262
  %v279 = vsub.f32 %v229, %v263
  %v280 = vsub.f32 %v232, %v264
  %v281 = vmul.f32 %v265, 0.06666667
  %v282 = vmul.f32 %v266, 0.06666667
  %v283 = vmul.f32 %v267, 0.06666667
  %v284 = vmul.f32 %v268, 0.06666667
  %v285 = vmul.f32 %v269, 0.06666667
  %v286 = vmul.f32 %v270, 0.06666667
  %v287 = vmul.f32 %v271, 0.06666667
  %v288 = vmul.f32 %v272, 0.06666667
  %v289 = vmul.f32 %v273, 0.06666667
  %v290 = vmul.f32 %v274, 0.06666667
  %v291 = vmul.f32 %v275, 0.06666667
  %v292 = vmul.f32 %v276, 0.06666667
  %v293 = vmul.f32 %v277, 0.06666667
  %v294 = vmul.f32 %v278, 0.06666667
  %v295 = vmul.f32 %v279, 0.06666667
  %v296 = vmul.f32 %v280, 0.06666667
  %vm297 = vcmask 7168
  %298 = vst.msk [vmem:[%s1] sm:$0xff] %vm297, %v281
  %299 = vst.msk [vmem:[%s1 + $0x8] sm:$0xff] %vm297, %v282
  %300 = vst.msk [vmem:[%s1 + $0x10] sm:$0xff] %vm297, %v283
  %301 = vst.msk [vmem:[%s1 + $0x18] sm:$0xff] %vm297, %v284
  %302 = vst.msk [vmem:[%s1 + $0x20] sm:$0xff] %vm297, %v285
  %303 = vst.msk [vmem:[%s1 + $0x28] sm:$0xff] %vm297, %v286
  %304 = vst.msk [vmem:[%s1 + $0x30] sm:$0xff] %vm297, %v287
  %305 = vst.msk [vmem:[%s1 + $0x38] sm:$0xff] %vm297, %v288
  %306 = vst.msk [vmem:[%s1 + $0x40] sm:$0xff] %vm297, %v289
  %307 = vst.msk [vmem:[%s1 + $0x48] sm:$0xff] %vm297, %v290
  %308 = vst.msk [vmem:[%s1 + $0x50] sm:$0xff] %vm297, %v291
  %309 = vst.msk [vmem:[%s1 + $0x58] sm:$0xff] %vm297, %v292
  %310 = vst.msk [vmem:[%s1 + $0x60] sm:$0xff] %vm297, %v293
  %311 = vst.msk [vmem:[%s1 + $0x68] sm:$0xff] %vm297, %v294
  %312 = vst.msk [vmem:[%s1 + $0x70] sm:$0xff] %vm297, %v295
  %313 = vst.msk [vmem:[%s1 + $0x78] sm:$0xff] %vm297, %v296
  // Predicated region
  $region6: #{tpu_custom_call.1} parent=0 // pred_check
    _
  $region7: #{tpu_custom_call.1} parent=0 // pred_check_branch
    %315 = sbr.rel (0) target = $region9
  $region8: #{tpu_custom_call.1} parent=0 // pred_region
    _
  $region9: #{tpu_custom_call.1} parent=0 // pred_fallthru
    _
  // Predicated region
  $region10: #{tpu_custom_call.1} parent=0 // pred_check
    _
  $region11: #{tpu_custom_call.1} parent=0 // pred_check_branch
    %317 = sbr.rel (0) target = $region13
  $region12: #{tpu_custom_call.1} parent=0 // pred_region
    _
  $region13: #{tpu_custom_call.1} parent=0 // pred_fallthru
    _

</llo_original>
